<compile_context>
chip_gen: v5e
topology: v5e:2x2
jax: 0.10.0
libtpu: 0.0.40
codegen_flags: <defaults>
</compile_context>

<pallas_src>
import numpy as np
import jax
import jax.numpy as jnp
from jax import lax
from jax.experimental import pallas as pl
from jax.experimental.pallas import tpu as pltpu

LANES = 128  # batch rows are packed along the output lane axis


def _round_up(x, m):
    return ((x + m - 1) // m) * m


def critic_kernel(obs_ref, act_ref, w1_ref, w2_ref, w3_ref, pvec_ref, q_ref):
    h0 = w1_ref.shape[1]
    h1 = w3_ref.shape[1]

    # Packed small f32 parameters: row 0 = b1+b2, row 1 = b3, row 2 = output
    # weight row, row 3 lane 0 = output bias.  All slices are static.
    b12 = pvec_ref[0:1, 0:h0]     # (1, h0)
    b3 = pvec_ref[1:2, 0:h1]      # (1, h1)
    wo = pvec_ref[2:3, 0:h1]      # (1, h1)
    bo = pvec_ref[3:4, 0:1]       # (1, 1)

    # layer_1(obs) + layer_2(action)  (no activation, matching PyTorch).
    # bf16 operands on the MXU, f32 accumulation.
    h = (jnp.dot(obs_ref[...], w1_ref[...], preferred_element_type=jnp.float32)
         + jnp.dot(act_ref[...], w2_ref[...], preferred_element_type=jnp.float32)
         + b12)                                               # (tb, h0) f32

    # relu(layer_3(h))
    h = jnp.dot(h.astype(jnp.bfloat16), w3_ref[...],
                preferred_element_type=jnp.float32) + b3      # (tb, h1) f32
    h = jnp.maximum(h, 0.0)

    # output(h) computed transposed: contract the h1 axis of both operands,
    # (1, h1) x (tb, h1) -> (1, tb).  Batch ends up on the lane axis, so the
    # store (and the HBM output) is compact and lane-dense.
    q_row = lax.dot_general(wo, h, (((1,), (1,)), ((), ())),
                            preferred_element_type=jnp.float32)   # (1, tb)
    q_ref[...] = (q_row + bo).astype(q_ref.dtype)


def critic_forward(obs, action, fused_params, *, block_batch=4096):
    """Whole critic MLP in a single Pallas call, tiled over the batch."""
    w1, w2, w3, pvec = fused_params
    batch, obs_dim = obs.shape
    action_dim = action.shape[1]
    h0 = w1.shape[1]
    h1 = w3.shape[1]

    # bf16 activation stream (MXU-native); accumulation stays f32 in-kernel.
    obs = obs.astype(jnp.bfloat16)
    action = action.astype(jnp.bfloat16)

    # Pad only to a multiple of 128 (lane packing), never to a multiple of tb.
    batch_pad = _round_up(batch, LANES)
    if batch_pad != batch:
        pad = batch_pad - batch                      # < 128 rows
        obs = jnp.pad(obs, ((0, pad), (0, 0)))
        action = jnp.pad(action, ((0, pad), (0, 0)))

    # Tile size: multiple of 128, capped by block_batch, and chosen so there
    # are >= 2 grid steps whenever batch > 128 (v7x has 2 TensorCores).
    tb_cap = max(LANES, (int(block_batch) // LANES) * LANES)
    if batch_pad <= LANES:
        tb = LANES
    else:
        tb = min(tb_cap, _round_up((batch_pad + 1) // 2, LANES))
    grid = (pl.cdiv(batch_pad, tb),)

    flops = 2 * batch_pad * (obs_dim * h0 + action_dim * h0 + h0 * h1 + h1)
    bytes_accessed = int(2 * batch_pad * (obs_dim + action_dim)   # bf16 acts
                         + 2 * (w1.size + w2.size + w3.size)      # bf16 weights
                         + 4 * pvec.size
                         + 4 * batch_pad)                         # f32 output

    out = pl.pallas_call(
        critic_kernel,
        out_shape=jax.ShapeDtypeStruct((1, batch_pad), jnp.float32),
        grid=grid,
        in_specs=[
            pl.BlockSpec((tb, obs_dim), lambda i: (i, 0)),      # obs: tiled
            pl.BlockSpec((tb, action_dim), lambda i: (i, 0)),   # action: tiled
            pl.BlockSpec(w1.shape, lambda i: (0, 0)),           # weights: resident
            pl.BlockSpec(w2.shape, lambda i: (0, 0)),
            pl.BlockSpec(w3.shape, lambda i: (0, 0)),
            pl.BlockSpec(pvec.shape, lambda i: (0, 0)),
        ],
        out_specs=pl.BlockSpec((1, tb), lambda i: (0, i)),
        compiler_params=pltpu.CompilerParams(
            dimension_semantics=("parallel",),
            vmem_limit_bytes=48 * 1024 * 1024),
        cost_estimate=pl.CostEstimate(
            flops=flops, transcendentals=0, bytes_accessed=bytes_accessed),
    )(obs, action, w1, w2, w3, pvec)

    return out[0, :batch].reshape(batch, 1)


def init_linear(key, in_dim, out_dim, std=np.sqrt(2), bias_const=0.0):
    """Mimic layer_init: orthogonal weight (gain=std), constant bias.

    Returns weight transposed to (in_dim, out_dim) plus bias (1, out_dim).
    """
    w = jax.nn.initializers.orthogonal(scale=std)(key, (out_dim, in_dim), jnp.float32)
    b = jnp.full((1, out_dim), bias_const, dtype=jnp.float32)
    return w.T, b


def make_params(key, obs_dim, action_dim, hidden_sizes):
    """Build PyTorch-style per-layer params, then fuse/pack them for the kernel."""
    h0, h1 = hidden_sizes
    k1, k2, k3, k4 = jax.random.split(key, 4)
    w1, b1 = init_linear(k1, obs_dim, h0)
    w2, b2 = init_linear(k2, action_dim, h0)
    w3, b3 = init_linear(k3, h0, h1)
    wo, bo = init_linear(k4, h1, 1)
    raw = ((w1, b1), (w2, b2), (w3, b3), (wo, bo))

    # Pack all small f32 parameters into one lane-padded (4, P) array.
    P = _round_up(max(h0, h1), 128)
    pvec = jnp.zeros((4, P), dtype=jnp.float32)
    pvec = pvec.at[0, :h0].set((b1 + b2)[0])           # b1 + b2
    pvec = pvec.at[1, :h1].set(b3[0])                  # b3
    pvec = pvec.at[2, :h1].set(wo[:, 0])               # output weight row
    pvec = pvec.at[3, 0].set(bo[0, 0])                 # output bias

    fused = (w1.astype(jnp.bfloat16), w2.astype(jnp.bfloat16),
             w3.astype(jnp.bfloat16), pvec)
    return fused, raw


def reference_forward(obs, action, raw_params):
    """Pure f32 reference matching the PyTorch module."""
    (w1, b1), (w2, b2), (w3, b3), (wo, bo) = raw_params
    q = obs @ w1 + b1 + action @ w2 + b2
    q = jnp.maximum(q @ w3 + b3, 0.0)
    return q @ wo + bo


def reference_forward_bf16(obs, action, raw_params):
    """Reference with the kernel's bf16 operand rounding / f32 accumulation."""
    (w1, b1), (w2, b2), (w3, b3), (wo, bo) = raw_params
    bf = jnp.bfloat16
    h = (jnp.dot(obs.astype(bf), w1.astype(bf), preferred_element_type=jnp.float32)
         + jnp.dot(action.astype(bf), w2.astype(bf), preferred_element_type=jnp.float32)
         + (b1 + b2))
    h = jnp.dot(h.astype(bf), w3.astype(bf), preferred_element_type=jnp.float32) + b3
    h = jnp.maximum(h, 0.0)
    return h @ wo + bo


if __name__ == "__main__":
    key = jax.random.PRNGKey(0)
    _, _, k_params = jax.random.split(key, 3)

    obs_dim = 8          # LunarLanderContinuous observation dim
    action_dim = 2       # LunarLanderContinuous action dim
    hidden_sizes = (32, 32)

    fused, raw = make_params(k_params, obs_dim, action_dim, hidden_sizes)

    def run_case(batch, seed, **kw):
        ko, ka = jax.random.split(jax.random.PRNGKey(seed), 2)
        obs = jax.random.normal(ko, (batch, obs_dim), dtype=jnp.float32)
        act = jax.random.normal(ka, (batch, action_dim), dtype=jnp.float32)
        q = jax.block_until_ready(critic_forward(obs, act, fused, **kw))
        assert q.shape == (batch, 1)
        # Exact-math check (same bf16 rounding as the kernel, f32 accumulation).
        q_bf = reference_forward_bf16(obs, act, raw)
        np.testing.assert_allclose(np.asarray(q), np.asarray(q_bf),
                                   rtol=1e-2, atol=1e-2)
        # Sanity check against the full-f32 PyTorch-equivalent reference.
        q_f32 = reference_forward(obs, act, raw)
        np.testing.assert_allclose(np.asarray(q), np.asarray(q_f32),
                                   rtol=5e-2, atol=2e-1)

    run_case(4, 0)                       # tiny batch: single 128-row block (padded)
    run_case(300, 1, block_batch=256)    # pad->384, grid=2, ragged last block
    run_case(1024, 2)                    # two 512-row blocks (v7x 2-TC path)

    print("KERNEL_OK")
</pallas_src>

<mosaic_0001>
module attributes {stable_mosaic.version = 11 : i64} {
  func.func @critic_kernel(%arg0: i32, %arg1: memref<128x8xbf16, #tpu.memory_space<vmem>>, %arg2: memref<128x2xbf16, #tpu.memory_space<vmem>>, %arg3: memref<8x32xbf16, #tpu.memory_space<vmem>>, %arg4: memref<2x32xbf16, #tpu.memory_space<vmem>>, %arg5: memref<32x32xbf16, #tpu.memory_space<vmem>>, %arg6: memref<4x128xf32, #tpu.memory_space<vmem>>, %arg7: memref<1x128xf32, #tpu.memory_space<vmem>>) attributes {dimension_semantics = [#tpu.dimension_semantics<parallel>], iteration_bounds = array<i64: 1>, scalar_prefetch = 0 : i64, scratch_operands = 0 : i64, tpu.core_type = #tpu.core_type<tc>, window_params = [{transform_indices = @transform_0, window_bounds = array<i64: 128, 8>}, {transform_indices = @transform_1, window_bounds = array<i64: 128, 2>}, {pipeline_mode = #tpu.pipeline_mode<synchronous>, transform_indices = @transform_2, window_bounds = array<i64: 8, 32>}, {pipeline_mode = #tpu.pipeline_mode<synchronous>, transform_indices = @transform_3, window_bounds = array<i64: 2, 32>}, {pipeline_mode = #tpu.pipeline_mode<synchronous>, transform_indices = @transform_4, window_bounds = array<i64: 32, 32>}, {pipeline_mode = #tpu.pipeline_mode<synchronous>, transform_indices = @transform_5, window_bounds = array<i64: 4, 128>}, {transform_indices = @transform_6, window_bounds = array<i64: 1, 128>}]} {
    %c0 = arith.constant 0 : index
    %c0_0 = arith.constant 0 : index
    %0 = vector.load %arg6[%c0, %c0_0] : memref<4x128xf32, #tpu.memory_space<vmem>>, vector<1x32xf32>
    %c1 = arith.constant 1 : index
    %c0_1 = arith.constant 0 : index
    %1 = vector.load %arg6[%c1, %c0_1] : memref<4x128xf32, #tpu.memory_space<vmem>>, vector<1x32xf32>
    %c2 = arith.constant 2 : index
    %c0_2 = arith.constant 0 : index
    %2 = vector.load %arg6[%c2, %c0_2] : memref<4x128xf32, #tpu.memory_space<vmem>>, vector<1x32xf32>
    %c3 = arith.constant 3 : index
    %c0_3 = arith.constant 0 : index
    %3 = vector.load %arg6[%c3, %c0_3] : memref<4x128xf32, #tpu.memory_space<vmem>>, vector<1x1xf32>
    %c0_4 = arith.constant 0 : index
    %c0_5 = arith.constant 0 : index
    %4 = vector.load %arg1[%c0_4, %c0_5] : memref<128x8xbf16, #tpu.memory_space<vmem>>, vector<128x8xbf16>
    %c0_6 = arith.constant 0 : index
    %c0_7 = arith.constant 0 : index
    %5 = vector.load %arg3[%c0_6, %c0_7] : memref<8x32xbf16, #tpu.memory_space<vmem>>, vector<8x32xbf16>
    %cst = arith.constant dense<0.000000e+00> : vector<128x32xf32>
    %6 = tpu.matmul %4, %5, %cst {dimension_numbers = #tpu.dot_dimension_numbers<[1], [0], [0], [1], [0, 0, 1, 1], [], []>} : vector<128x8xbf16>, vector<8x32xbf16>, vector<128x32xf32> -> vector<128x32xf32>
    %c0_8 = arith.constant 0 : index
    %c0_9 = arith.constant 0 : index
    %7 = vector.load %arg2[%c0_8, %c0_9] : memref<128x2xbf16, #tpu.memory_space<vmem>>, vector<128x2xbf16>
    %c0_10 = arith.constant 0 : index
    %c0_11 = arith.constant 0 : index
    %8 = vector.load %arg4[%c0_10, %c0_11] : memref<2x32xbf16, #tpu.memory_space<vmem>>, vector<2x32xbf16>
    %cst_12 = arith.constant dense<0.000000e+00> : vector<128x32xf32>
    %9 = tpu.matmul %7, %8, %cst_12 {dimension_numbers = #tpu.dot_dimension_numbers<[1], [0], [0], [1], [0, 0, 1, 1], [], []>} : vector<128x2xbf16>, vector<2x32xbf16>, vector<128x32xf32> -> vector<128x32xf32>
    %10 = arith.addf %6, %9 : vector<128x32xf32>
    %11 = vector.broadcast %0 : vector<1x32xf32> to vector<128x32xf32>
    %12 = arith.addf %10, %11 : vector<128x32xf32>
    %13 = arith.truncf %12 : vector<128x32xf32> to vector<128x32xbf16>
    %c0_13 = arith.constant 0 : index
    %c0_14 = arith.constant 0 : index
    %14 = vector.load %arg5[%c0_13, %c0_14] : memref<32x32xbf16, #tpu.memory_space<vmem>>, vector<32x32xbf16>
    %cst_15 = arith.constant dense<0.000000e+00> : vector<128x32xf32>
    %15 = tpu.matmul %13, %14, %cst_15 {dimension_numbers = #tpu.dot_dimension_numbers<[1], [0], [0], [1], [0, 0, 1, 1], [], []>} : vector<128x32xbf16>, vector<32x32xbf16>, vector<128x32xf32> -> vector<128x32xf32>
    %16 = vector.broadcast %1 : vector<1x32xf32> to vector<128x32xf32>
    %17 = arith.addf %15, %16 : vector<128x32xf32>
    %cst_16 = arith.constant 0.000000e+00 : f32
    %18 = vector.broadcast %cst_16 : f32 to vector<128x32xf32>
    %19 = arith.maximumf %17, %18 : vector<128x32xf32>
    %cst_17 = arith.constant dense<0.000000e+00> : vector<1x128xf32>
    %20 = tpu.matmul %2, %19, %cst_17 {dimension_numbers = #tpu.dot_dimension_numbers<[1], [1], [0], [0], [0, 0, 1, 0], [], []>} : vector<1x32xf32>, vector<128x32xf32>, vector<1x128xf32> -> vector<1x128xf32>
    %21 = vector.broadcast %3 : vector<1x1xf32> to vector<1x128xf32>
    %22 = arith.addf %20, %21 : vector<1x128xf32>
    %c0_18 = arith.constant 0 : index
    %c0_19 = arith.constant 0 : index
    %23 = vector.load %arg7[%c0_18, %c0_19] : memref<1x128xf32, #tpu.memory_space<vmem>>, vector<1x128xf32>
    tpu.vector_store %arg7[%c0_18, %c0_19], %22 {strides = array<i32>} : memref<1x128xf32, #tpu.memory_space<vmem>>, vector<1x128xf32>,
    return
  }
  func.func @transform_0(%arg0: i32) -> (i32, i32) {
    %c0_i32 = arith.constant 0 : i32
    %c0_i32_0 = arith.constant 0 : i32
    return %arg0, %c0_i32 : i32, i32
  }
  func.func @transform_1(%arg0: i32) -> (i32, i32) {
    %c0_i32 = arith.constant 0 : i32
    %c0_i32_0 = arith.constant 0 : i32
    return %arg0, %c0_i32 : i32, i32
  }
  func.func @transform_2(%arg0: i32) -> (i32, i32) {
    %c0_i32 = arith.constant 0 : i32
    %c0_i32_0 = arith.constant 0 : i32
    %c0_i32_1 = arith.constant 0 : i32
    return %c0_i32, %c0_i32_0 : i32, i32
  }
  func.func @transform_3(%arg0: i32) -> (i32, i32) {
    %c0_i32 = arith.constant 0 : i32
    %c0_i32_0 = arith.constant 0 : i32
    %c0_i32_1 = arith.constant 0 : i32
    return %c0_i32, %c0_i32_0 : i32, i32
  }
  func.func @transform_4(%arg0: i32) -> (i32, i32) {
    %c0_i32 = arith.constant 0 : i32
    %c0_i32_0 = arith.constant 0 : i32
    %c0_i32_1 = arith.constant 0 : i32
    return %c0_i32, %c0_i32_0 : i32, i32
  }
  func.func @transform_5(%arg0: i32) -> (i32, i32) {
    %c0_i32 = arith.constant 0 : i32
    %c0_i32_0 = arith.constant 0 : i32
    %c0_i32_1 = arith.constant 0 : i32
    return %c0_i32, %c0_i32_0 : i32, i32
  }
  func.func @transform_6(%arg0: i32) -> (i32, i32) {
    %c0_i32 = arith.constant 0 : i32
    %c0_i32_0 = arith.constant 0 : i32
    return %c0_i32, %arg0 : i32, i32
  }
}

</mosaic_0001>

<llo_original>
// kernel: tpu_custom_call.1
$region0: #{tpu_custom_call.1}
  #allocation0 [shape = 'u32[]', space=smem, size = 0x4, offset = 0x4, fixed_abs, tag = 'smem constant byte address 0x4 - core index']
  #allocation1 [shape = 'u32[72,128]{1,0:T(1,128)}', space=vmem, size = 0x9000, scoped, tag = 'internal scratch']
  %s0 = inlined_call_operand.vmem [shape: bf16[128,8], index: 0, kind: input, shape index: {}]
  %s1 = inlined_call_operand.vmem [shape: bf16[128,2], index: 1, kind: input, shape index: {}]
  %s2 = inlined_call_operand.vmem [shape: bf16[8,32], index: 2, kind: input, shape index: {}]
  %s3 = inlined_call_operand.vmem [shape: bf16[2,32], index: 3, kind: input, shape index: {}]
  %s4 = inlined_call_operand.vmem [shape: bf16[32,32], index: 4, kind: input, shape index: {}]
  %s5 = inlined_call_operand.vmem [shape: f32[4,128], index: 5, kind: input, shape index: {}]
  %s6 = inlined_call_operand.hbm [shape: f32[1,128], index: 6, kind: output, shape index: {}]
  %s7 = sld [smem:[#allocation0]]
  $region34: #{tpu_custom_call.1} parent=0
    _
  %s9 = ssub.s32 1, %s7
  %s10 = scalar_select 0, %s9, %s7
  $region1: #{tpu_custom_call.1} parent=0
    #allocation2 [shape = 'u8[512]{0}', space=vmem, size = 0x400, scoped, tag = 'output window, operand 0, single buffered']
    #allocation3 [shape = 's32[1]{0}', space=sflag, size = 0x4, scoped, tag = 'scoped memory for tpu_custom_call.1']
    %11 = vsyncpa [#allocation3], 0
    // Predicated region
    $region2: #{tpu_custom_call.1} parent=1 // pred_check
      _
    $region3: #{tpu_custom_call.1} parent=1 // pred_check_branch
      %13 = sbr.rel (0) target = $region5
    $region4: #{tpu_custom_call.1} parent=1 // pred_region
      _
    $region5: #{tpu_custom_call.1} parent=1 // pred_fallthru
      _
    // Predicated region
    $region6: #{tpu_custom_call.1} parent=1 // pred_check
      _
    $region7: #{tpu_custom_call.1} parent=1 // pred_check_branch
      %15 = sbr.rel (0) target = $region9
    $region8: #{tpu_custom_call.1} parent=1 // pred_region
      _
    $region9: #{tpu_custom_call.1} parent=1 // pred_fallthru
      _
    // Predicated region
    $region10: #{tpu_custom_call.1} parent=1 // pred_check
      _
    $region11: #{tpu_custom_call.1} parent=1 // pred_check_branch
      %17 = sbr.rel (0) target = $region13
    $region12: #{tpu_custom_call.1} parent=1 // pred_region
      _
    $region13: #{tpu_custom_call.1} parent=1 // pred_fallthru
      _
    // Predicated region
    $region14: #{tpu_custom_call.1} parent=1 // pred_check
      _
    $region15: #{tpu_custom_call.1} parent=1 // pred_check_branch
      %19 = sbr.rel (0) target = $region17
    $region16: #{tpu_custom_call.1} parent=1 // pred_region
      _
    $region17: #{tpu_custom_call.1} parent=1 // pred_fallthru
      _
    // Predicated region
    $region18: #{tpu_custom_call.1} parent=1 // pred_check
      _
    $region19: #{tpu_custom_call.1} parent=1 // pred_check_branch
      %21 = sbr.rel (0) target = $region21
    $region20: #{tpu_custom_call.1} parent=1 // pred_region
      _
    $region21: #{tpu_custom_call.1} parent=1 // pred_fallthru
      _
    // Predicated region
    $region22: #{tpu_custom_call.1} parent=1 // pred_check
      _
    $region23: #{tpu_custom_call.1} parent=1 // pred_check_branch
      %23 = sbr.rel (0) target = $region25
    $region24: #{tpu_custom_call.1} parent=1 // pred_region
      _
    $region25: #{tpu_custom_call.1} parent=1 // pred_fallthru
      _
    %v25 = vld [vmem:[%s5] sm:$0x1]
    %v26 = vld [vmem:[%s5 + $0x1] sm:$0x1]
    %v27 = vld [vmem:[%s5 + $0x2] sm:$0x1]
    %v28 = vld [vmem:[%s5 + $0x3] sm:$0x1]
    %v29 = vld [vmem:[%s0] sm:$0xf]
    %v30 = vld [vmem:[%s0 + $0x4] sm:$0xf]
    %v31 = vld [vmem:[%s0 + $0x8] sm:$0xf]
    %v32 = vld [vmem:[%s0 + $0xc] sm:$0xf]
    %v33 = vld [vmem:[%s0 + $0x10] sm:$0xf]
    %v34 = vld [vmem:[%s0 + $0x14] sm:$0xf]
    %v35 = vld [vmem:[%s0 + $0x18] sm:$0xf]
    %v36 = vld [vmem:[%s0 + $0x1c] sm:$0xf]
    %v37 = vld [vmem:[%s0 + $0x20] sm:$0xf]
    %v38 = vld [vmem:[%s0 + $0x24] sm:$0xf]
    %v39 = vld [vmem:[%s0 + $0x28] sm:$0xf]
    %v40 = vld [vmem:[%s0 + $0x2c] sm:$0xf]
    %v41 = vld [vmem:[%s0 + $0x30] sm:$0xf]
    %v42 = vld [vmem:[%s0 + $0x34] sm:$0xf]
    %v43 = vld [vmem:[%s0 + $0x38] sm:$0xf]
    %v44 = vld [vmem:[%s0 + $0x3c] sm:$0xf]
    %v45 = vld [vmem:[%s2] sm:$0xf]
    %v46 = vld [vmem:[%s1] sm:$0xf]
    %v47 = vld [vmem:[%s1 + $0x4] sm:$0xf]
    %v48 = vld [vmem:[%s1 + $0x8] sm:$0xf]
    %v49 = vld [vmem:[%s1 + $0xc] sm:$0xf]
    %v50 = vld [vmem:[%s1 + $0x10] sm:$0xf]
    %v51 = vld [vmem:[%s1 + $0x14] sm:$0xf]
    %v52 = vld [vmem:[%s1 + $0x18] sm:$0xf]
    %v53 = vld [vmem:[%s1 + $0x1c] sm:$0xf]
    %v54 = vld [vmem:[%s1 + $0x20] sm:$0xf]
    %v55 = vld [vmem:[%s1 + $0x24] sm:$0xf]
    %v56 = vld [vmem:[%s1 + $0x28] sm:$0xf]
    %v57 = vld [vmem:[%s1 + $0x2c] sm:$0xf]
    %v58 = vld [vmem:[%s1 + $0x30] sm:$0xf]
    %v59 = vld [vmem:[%s1 + $0x34] sm:$0xf]
    %v60 = vld [vmem:[%s1 + $0x38] sm:$0xf]
    %v61 = vld [vmem:[%s1 + $0x3c] sm:$0xf]
    %v62 = vld [vmem:[%s3] sm:$0x1]
    %v79 = vunpack.c.l.b16 %v46
    %v80 = vunpack.c.l.b16 %v47
    %v81 = vunpack.c.l.b16 %v48
    %v82 = vunpack.c.l.b16 %v49
    %v83 = vunpack.c.l.b16 %v50
    %v84 = vunpack.c.l.b16 %v51
    %v85 = vunpack.c.l.b16 %v52
    %v86 = vunpack.c.l.b16 %v53
    %v87 = vunpack.c.l.b16 %v54
    %v88 = vunpack.c.l.b16 %v55
    %v89 = vunpack.c.l.b16 %v56
    %v90 = vunpack.c.l.b16 %v57
    %v91 = vunpack.c.l.b16 %v58
    %v92 = vunpack.c.l.b16 %v59
    %v93 = vunpack.c.l.b16 %v60
    %v94 = vunpack.c.l.b16 %v61
    %v95 = vpack.c.b16 %v80, %v79
    %v96 = vpack.c.b16 %v82, %v81
    %v97 = vpack.c.b16 %v84, %v83
    %v98 = vpack.c.b16 %v86, %v85
    %v99 = vpack.c.b16 %v88, %v87
    %v100 = vpack.c.b16 %v90, %v89
    %v101 = vpack.c.b16 %v92, %v91
    %v102 = vpack.c.b16 %v94, %v93
    %vm103 = vcmask 15360
    %v105 = vsel %vm103, %v95, 0
    %v108 = vsel %vm103, %v96, 0
    %v111 = vsel %vm103, %v97, 0
    %v114 = vsel %vm103, %v98, 0
    %v117 = vsel %vm103, %v99, 0
    %v120 = vsel %vm103, %v100, 0
    %v123 = vsel %vm103, %v101, 0
    %v126 = vsel %vm103, %v102, 0
    %vm128 = vcmask 1040384
    %v130 = vsel %vm128, %v62, 0
    %132 = vmatpush.bf16.msra.mxu0 0
    %133 = vmatpush.bf16.msra.mxu0 0
    %134 = vmatpush.bf16.msra.mxu0 0
    %135 = vmatpush.bf16.msra.mxu0 0
    %136 = vmatpush.bf16.msra.mxu0 0
    %137 = vmatpush.bf16.msra.mxu0 0
    %138 = vmatpush.bf16.msra.mxu0 0
    %139 = vmatpush.bf16.msra.mxu0 %v130
    %140 = vmatmul.bf16.gmra.mxu0 %v105
    %v141 = vpop.f32.mrf.mxu0
    %v142 = vadd.f32 0.0, %v141
    %v143 = vpop.f32.mrf.mxu0
    %v144 = vadd.f32 0.0, %v143
    %145 = vmatmul.bf16.gmra.mxu0 %v108
    %v146 = vpop.f32.mrf.mxu0
    %v147 = vadd.f32 0.0, %v146
    %v148 = vpop.f32.mrf.mxu0
    %v149 = vadd.f32 0.0, %v148
    %150 = vmatmul.bf16.gmra.mxu0 %v111
    %v151 = vpop.f32.mrf.mxu0
    %v152 = vadd.f32 0.0, %v151
    %v153 = vpop.f32.mrf.mxu0
    %v154 = vadd.f32 0.0, %v153
    %155 = vmatmul.bf16.gmra.mxu0 %v114
    %v156 = vpop.f32.mrf.mxu0
    %v157 = vadd.f32 0.0, %v156
    %v158 = vpop.f32.mrf.mxu0
    %v159 = vadd.f32 0.0, %v158
    %160 = vmatmul.bf16.gmra.mxu0 %v117
    %v161 = vpop.f32.mrf.mxu0
    %v162 = vadd.f32 0.0, %v161
    %v163 = vpop.f32.mrf.mxu0
    %v164 = vadd.f32 0.0, %v163
    %165 = vmatmul.bf16.gmra.mxu0 %v120
    %v166 = vpop.f32.mrf.mxu0
    %v167 = vadd.f32 0.0, %v166
    %v168 = vpop.f32.mrf.mxu0
    %v169 = vadd.f32 0.0, %v168
    %170 = vmatmul.bf16.gmra.mxu0 %v123
    %v171 = vpop.f32.mrf.mxu0
    %v172 = vadd.f32 0.0, %v171
    %v173 = vpop.f32.mrf.mxu0
    %v174 = vadd.f32 0.0, %v173
    %175 = vmatmul.bf16.gmra.mxu0 %v126
    %v176 = vpop.f32.mrf.mxu0
    %v177 = vadd.f32 0.0, %v176
    %v178 = vpop.f32.mrf.mxu0
    %v179 = vadd.f32 0.0, %v178
    %180 = vdwg.mxu0
    %v197 = vunpack.c.l.b16 %v29
    %v198 = vunpack.c.l.b16 %v30
    %v199 = vunpack.c.l.b16 %v31
    %v200 = vunpack.c.l.b16 %v32
    %v201 = vunpack.c.l.b16 %v33
    %v202 = vunpack.c.l.b16 %v34
    %v203 = vunpack.c.l.b16 %v35
    %v204 = vunpack.c.l.b16 %v36
    %v205 = vunpack.c.l.b16 %v37
    %v206 = vunpack.c.l.b16 %v38
    %v207 = vunpack.c.l.b16 %v39
    %v208 = vunpack.c.l.b16 %v40
    %v209 = vunpack.c.l.b16 %v41
    %v210 = vunpack.c.l.b16 %v42
    %v211 = vunpack.c.l.b16 %v43
    %v212 = vunpack.c.l.b16 %v44
    %v213 = vpack.c.b16 %v198, %v197
    %v214 = vpack.c.b16 %v200, %v199
    %v215 = vpack.c.b16 %v202, %v201
    %v216 = vpack.c.b16 %v204, %v203
    %v217 = vpack.c.b16 %v206, %v205
    %v218 = vpack.c.b16 %v208, %v207
    %v219 = vpack.c.b16 %v210, %v209
    %v220 = vpack.c.b16 %v212, %v211
    %vm221 = vcmask 64512
    %v223 = vsel %vm221, %v213, 0
    %v226 = vsel %vm221, %v214, 0
    %v229 = vsel %vm221, %v215, 0
    %v232 = vsel %vm221, %v216, 0
    %v235 = vsel %vm221, %v217, 0
    %v238 = vsel %vm221, %v218, 0
    %v241 = vsel %vm221, %v219, 0
    %v244 = vsel %vm221, %v220, 0
    %vm246 = vcmask 1043456
    %v248 = vsel %vm246, %v45, 0
    %250 = vmatpush.bf16.msra.mxu0 0
    %251 = vmatpush.bf16.msra.mxu0 0
    %252 = vmatpush.bf16.msra.mxu0 0
    %253 = vmatpush.bf16.msra.mxu0 0
    %254 = vmatpush.bf16.msra.mxu0 0
    %255 = vmatpush.bf16.msra.mxu0 0
    %256 = vmatpush.bf16.msra.mxu0 0
    %257 = vmatpush.bf16.msra.mxu0 %v248
    %258 = vmatmul.bf16.gmra.mxu0 %v223
    %v259 = vpop.f32.mrf.mxu0
    %v260 = vadd.f32 %v142, %v259
    %v261 = vpop.f32.mrf.mxu0
    %v262 = vadd.f32 %v144, %v261
    %263 = vmatmul.bf16.gmra.mxu0 %v226
    %v264 = vpop.f32.mrf.mxu0
    %v265 = vadd.f32 %v147, %v264
    %v266 = vpop.f32.mrf.mxu0
    %v267 = vadd.f32 %v149, %v266
    %268 = vmatmul.bf16.gmra.mxu0 %v229
    %v269 = vpop.f32.mrf.mxu0
    %v270 = vadd.f32 %v152, %v269
    %v271 = vpop.f32.mrf.mxu0
    %v272 = vadd.f32 %v154, %v271
    %273 = vmatmul.bf16.gmra.mxu0 %v232
    %v274 = vpop.f32.mrf.mxu0
    %v275 = vadd.f32 %v157, %v274
    %v276 = vpop.f32.mrf.mxu0
    %v277 = vadd.f32 %v159, %v276
    %278 = vmatmul.bf16.gmra.mxu0 %v235
    %v279 = vpop.f32.mrf.mxu0
    %v280 = vadd.f32 %v162, %v279
    %v281 = vpop.f32.mrf.mxu0
    %v282 = vadd.f32 %v164, %v281
    %283 = vmatmul.bf16.gmra.mxu0 %v238
    %v284 = vpop.f32.mrf.mxu0
    %v285 = vadd.f32 %v167, %v284
    %v286 = vpop.f32.mrf.mxu0
    %v287 = vadd.f32 %v169, %v286
    %288 = vmatmul.bf16.gmra.mxu0 %v241
    %v289 = vpop.f32.mrf.mxu0
    %v290 = vadd.f32 %v172, %v289
    %v291 = vpop.f32.mrf.mxu0
    %v292 = vadd.f32 %v174, %v291
    %293 = vmatmul.bf16.gmra.mxu0 %v244
    %v294 = vpop.f32.mrf.mxu0
    %v295 = vadd.f32 %v177, %v294
    %v296 = vpop.f32.mrf.mxu0
    %v297 = vadd.f32 %v179, %v296
    %298 = vdwg.mxu0
    %v299 = vperm.slane %v25, 0
    %v300 = vadd.f32 %v260, %v299
    %v301 = vadd.f32 %v262, %v299
    %v302 = vadd.f32 %v265, %v299
    %v303 = vadd.f32 %v267, %v299
    %v304 = vadd.f32 %v270, %v299
    %v305 = vadd.f32 %v272, %v299
    %v306 = vadd.f32 %v275, %v299
    %v307 = vadd.f32 %v277, %v299
    %v308 = vadd.f32 %v280, %v299
    %v309 = vadd.f32 %v282, %v299
    %v310 = vadd.f32 %v285, %v299
    %v311 = vadd.f32 %v287, %v299
    %v312 = vadd.f32 %v290, %v299
    %v313 = vadd.f32 %v292, %v299
    %v314 = vadd.f32 %v295, %v299
    %v315 = vadd.f32 %v297, %v299
    %v316 = vpack.c.bf16 %v301, %v300
    %v317 = vpack.c.bf16 %v303, %v302
    %v318 = vpack.c.bf16 %v305, %v304
    %v319 = vpack.c.bf16 %v307, %v306
    %v320 = vpack.c.bf16 %v309, %v308
    %v321 = vpack.c.bf16 %v311, %v310
    %v322 = vpack.c.bf16 %v313, %v312
    %v323 = vpack.c.bf16 %v315, %v314
    %v324 = vld [vmem:[%s4] sm:$0xf]
    %v325 = vld [vmem:[%s4 + $0x4] sm:$0xf]
    %v326 = vld [vmem:[%s4 + $0x8] sm:$0xf]
    %v327 = vld [vmem:[%s4 + $0xc] sm:$0xf]
    %v328 = vperm.slane %v26, 0
    %v333 = vunpack.c.l.b16 %v324
    %v334 = vunpack.c.l.b16 %v325
    %v335 = vunpack.c.l.b16 %v326
    %v336 = vunpack.c.l.b16 %v327
    %v337 = vpack.c.b16 %v334, %v333
    %v338 = vpack.c.b16 %v336, %v335
    %vm341 = vcmask 261120
    %v343 = vsel %vm341, %v316, 0
    %v346 = vsel %vm341, %v317, 0
    %v349 = vsel %vm341, %v318, 0
    %v352 = vsel %vm341, %v319, 0
    %v355 = vsel %vm341, %v320, 0
    %v358 = vsel %vm341, %v321, 0
    %v361 = vsel %vm341, %v322, 0
    %v364 = vsel %vm341, %v323, 0
    %366 = vmatpush.bf16.msra.mxu0 0
    %367 = vmatpush.bf16.msra.mxu0 0
    %368 = vmatpush.bf16.msra.mxu0 0
    %369 = vmatpush.bf16.msra.mxu0 0
    %370 = vmatpush.bf16.msra.mxu0 0
    %371 = vmatpush.bf16.msra.mxu0 0
    %372 = vmatpush.bf16.msra.mxu0 %v338
    %373 = vmatpush.bf16.msra.mxu0 %v337
    %374 = vmatmul.bf16.gmra.mxu0 %v343
    %v375 = vpop.f32.mrf.mxu0
    %v376 = vadd.f32 %v328, %v375
    %v377 = vpop.f32.mrf.mxu0
    %v378 = vadd.f32 %v328, %v377
    %379 = vmatmul.bf16.gmra.mxu0 %v346
    %v380 = vpop.f32.mrf.mxu0
    %v381 = vadd.f32 %v328, %v380
    %v382 = vpop.f32.mrf.mxu0
    %v383 = vadd.f32 %v328, %v382
    %384 = vmatmul.bf16.gmra.mxu0 %v349
    %v385 = vpop.f32.mrf.mxu0
    %v386 = vadd.f32 %v328, %v385
    %v387 = vpop.f32.mrf.mxu0
    %v388 = vadd.f32 %v328, %v387
    %389 = vmatmul.bf16.gmra.mxu0 %v352
    %v390 = vpop.f32.mrf.mxu0
    %v391 = vadd.f32 %v328, %v390
    %v392 = vpop.f32.mrf.mxu0
    %v393 = vadd.f32 %v328, %v392
    %394 = vmatmul.bf16.gmra.mxu0 %v355
    %v395 = vpop.f32.mrf.mxu0
    %v396 = vadd.f32 %v328, %v395
    %v397 = vpop.f32.mrf.mxu0
    %v398 = vadd.f32 %v328, %v397
    %399 = vmatmul.bf16.gmra.mxu0 %v358
    %v400 = vpop.f32.mrf.mxu0
    %v401 = vadd.f32 %v328, %v400
    %v402 = vpop.f32.mrf.mxu0
    %v403 = vadd.f32 %v328, %v402
    %404 = vmatmul.bf16.gmra.mxu0 %v361
    %v405 = vpop.f32.mrf.mxu0
    %v406 = vadd.f32 %v328, %v405
    %v407 = vpop.f32.mrf.mxu0
    %v408 = vadd.f32 %v328, %v407
    %409 = vmatmul.bf16.gmra.mxu0 %v364
    %v410 = vpop.f32.mrf.mxu0
    %v411 = vadd.f32 %v328, %v410
    %v412 = vpop.f32.mrf.mxu0
    %v413 = vadd.f32 %v328, %v412
    %414 = vdwg.mxu0
    %v415 = vmax.f32 %v376, 0.0
    %v416 = vmax.f32 %v378, 0.0
    %v417 = vmax.f32 %v381, 0.0
    %v418 = vmax.f32 %v383, 0.0
    %v419 = vmax.f32 %v386, 0.0
    %v420 = vmax.f32 %v388, 0.0
    %v421 = vmax.f32 %v391, 0.0
    %v422 = vmax.f32 %v393, 0.0
    %v423 = vmax.f32 %v396, 0.0
    %v424 = vmax.f32 %v398, 0.0
    %v425 = vmax.f32 %v401, 0.0
    %v426 = vmax.f32 %v403, 0.0
    %v427 = vmax.f32 %v406, 0.0
    %v428 = vmax.f32 %v408, 0.0
    %v429 = vmax.f32 %v411, 0.0
    %v430 = vmax.f32 %v413, 0.0
    %432 = vset.pattern.permute.xlu0 0
    %433 = vperm.xlu0 %432, %v28
    %v434 = vpop.permute.xlu0 %433
    %v437 = vsel %vm341, %v27, 0
    %v440 = vsel %vm341, %v415, 0
    %v443 = vsel %vm341, %v416, 0
    %v446 = vsel %vm341, %v417, 0
    %v449 = vsel %vm341, %v418, 0
    %v452 = vsel %vm341, %v419, 0
    %v455 = vsel %vm341, %v420, 0
    %v458 = vsel %vm341, %v421, 0
    %v461 = vsel %vm341, %v422, 0
    %v464 = vsel %vm341, %v423, 0
    %v467 = vsel %vm341, %v424, 0
    %v470 = vsel %vm341, %v425, 0
    %v473 = vsel %vm341, %v426, 0
    %v476 = vsel %vm341, %v427, 0
    %v479 = vsel %vm341, %v428, 0
    %v482 = vsel %vm341, %v429, 0
    %v485 = vsel %vm341, %v430, 0
    %487 = vmatpush.xpose.msra.mxu0 %v485
    %488 = vmatpush.xpose.msra.mxu0 %v482
    %489 = vmatpush.xpose.msra.mxu0 %v479
    %490 = vmatpush.xpose.msra.mxu0 %v476
    %491 = vmatpush.xpose.msra.mxu0 %v473
    %492 = vmatpush.xpose.msra.mxu0 %v470
    %493 = vmatpush.xpose.msra.mxu0 %v467
    %494 = vmatpush.xpose.msra.mxu0 %v464
    %495 = vmatpush.xpose.msra.mxu0 %v461
    %496 = vmatpush.xpose.msra.mxu0 %v458
    %497 = vmatpush.xpose.msra.mxu0 %v455
    %498 = vmatpush.xpose.msra.mxu0 %v452
    %499 = vmatpush.xpose.msra.mxu0 %v449
    %500 = vmatpush.xpose.msra.mxu0 %v446
    %501 = vmatpush.xpose.msra.mxu0 %v443
    %502 = vmatpush.xpose.msra.mxu0 %v440
    %503 = vmatmul.f32.gmra.mxu0 %v437
    %v504 = vpop.f32.mrf.mxu0
    %v505 = vadd.f32 %v434, %v504
    %506 = vdwg.mxu0
    %507 = vst [vmem:[#allocation2] sm:$0x1] %v505
    // Predicated region
    $region26: #{tpu_custom_call.1} parent=1 // pred_check
      _
    $region27: #{tpu_custom_call.1} parent=1 // pred_check_branch
      %509 = sbr.rel (0) target = $region29
    $region28: #{tpu_custom_call.1} parent=1 // pred_region
      %511 = vsyncadd [#allocation3], 0
      %s513 = sshll.u32 [#allocation2], 4
      %s514 = int_to_ptr.vmem [resolvable:$true] %s513
      %s515 = sshll.u32 %s6, 4
      %s516 = int_to_ptr.hbm [resolvable:$true] %s515
      %518 = dma.vmem_to_hbm [thread:$0]  %s514, 16, %s516, [#allocation3]
    $region29: #{tpu_custom_call.1} parent=1 // pred_fallthru
      _
    // Predicated region
    $region30: #{tpu_custom_call.1} parent=1 // pred_check
      _
    $region31: #{tpu_custom_call.1} parent=1 // pred_check_branch
      %520 = sbr.rel (0) target = $region33
    $region32: #{tpu_custom_call.1} parent=1 // pred_region
      %522 = dma.done [#allocation3], 16
    $region33: #{tpu_custom_call.1} parent=1 // pred_fallthru
      _
    %523 = vsyncpa [#allocation3], 1

</llo_original>
